<compile_context>
chip_gen: v6e
topology: v6e:2x2x1
jax: 0.10.0
libtpu: 0.0.40
codegen_flags: <defaults>
</compile_context>

<pallas_src>
import math

import jax
import jax.numpy as jnp
from jax.experimental import pallas as pl
from jax.experimental.pallas import tpu as pltpu


def _reference(x, w1, b1, w2, b2):
    """Pure-JAX reference with PyTorch semantics: relu(x W1^T + b1) W2^T + b2."""
    return jnp.maximum(x @ w1.T + b1, 0.0) @ w2.T + b2


def _mlp_kernel(x_ref, w1_ref, b1_ref, w2_ref, b2_ref, o_ref):
    """One batch tile, packed layout.

    x_ref : (tbp, pack*D_in)   -- `pack` batch rows per packed row
    w1_ref: (pack*D_in, pack*H) block-diagonal packed W1^T
    b1_ref: (1, pack*H)
    w2_ref: (pack*H, pack*H)    block-diagonal packed W2^T
    b2_ref: (1, pack*H)
    o_ref : (tbp, pack*H)       lane-dense (last dim = 128 for H=32)
    """
    x = x_ref[...]
    # First Linear (tiny K = pack*D_in); f32 accumulation.
    h = jnp.dot(x, w1_ref[...], preferred_element_type=jnp.float32)
    h = jnp.maximum(h + b1_ref[...], 0.0)          # bias + ReLU on the VPU
    # Second Linear: (tbp, pack*H) @ (pack*H, pack*H) on the MXU.
    y = jnp.dot(h, w2_ref[...], preferred_element_type=jnp.float32)
    o_ref[...] = (y + b2_ref[...]).astype(o_ref.dtype)


def _round_up(n, m):
    return ((n + m - 1) // m) * m


def measurement_encoder(x, w1, b1, w2, b2, *, batch_tile=8192, min_pallas_batch=1024):
    """Forward pass of MeasurementEncoder.

    x : (B, D_in) f32
    w1: (H, D_in) f32   (PyTorch nn.Linear weight layout)
    b1: (H,)      f32
    w2: (H, H)    f32
    b2: (H,)      f32
    returns (B, H) f32
    """
    B, D_in = x.shape
    H = w1.shape[0]

    # Small-batch fast path: fused XLA; the kernel only pays off at large B.
    if B < min_pallas_batch:
        return _reference(x, w1, b1, w2, b2)

    # Lane-packing factor: put `pack` batch rows side by side on the 128 lanes.
    pack = 128 // H if (H <= 128 and 128 % H == 0) else 1

    # Pad batch only to a multiple of pack*8 (NOT to the tile size). Padding x
    # is tiny; when no padding is needed the final reshape is metadata-only.
    Bp = _round_up(B, pack * 8)
    if Bp != B:
        x = jnp.pad(x, ((0, Bp - B), (0, 0)))

    rows = Bp // pack
    x_packed = x.reshape(rows, pack * D_in)        # metadata-only reshape

    # Block-diagonal packed weights/biases (built once, negligible cost).
    eye = jnp.eye(pack, dtype=w1.dtype)
    w1p = jnp.kron(eye, w1.T)                      # (pack*D_in, pack*H)
    w2p = jnp.kron(eye, w2.T)                      # (pack*H,   pack*H)
    b1p = jnp.tile(b1, pack).reshape(1, pack * H)
    b2p = jnp.tile(b2, pack).reshape(1, pack * H)

    # Batch tile (in original batch rows): big enough for ~1 MB of output per
    # grid step, rounded so the packed row tile is sublane-aligned, and capped
    # to Bp/2 so the "parallel" grid has >= 2 blocks (v7x: 2 TensorCores).
    r = max(512, pack * 8)
    tb = max(r, (batch_tile // r) * r)
    tb = min(tb, max(r, ((Bp // 2) // r) * r))
    tbp = tb // pack                               # packed rows per grid step
    grid = (pl.cdiv(rows, tbp),)                   # ragged last block is masked

    pkH = pack * H
    pkD = pack * D_in

    out_packed = pl.pallas_call(
        _mlp_kernel,
        out_shape=jax.ShapeDtypeStruct((rows, pkH), x.dtype),
        grid=grid,
        in_specs=[
            pl.BlockSpec((tbp, pkD), lambda i: (i, 0)),   # x: streamed over batch
            pl.BlockSpec((pkD, pkH), lambda i: (0, 0)),   # W1p: VMEM-resident
            pl.BlockSpec((1, pkH), lambda i: (0, 0)),     # b1p
            pl.BlockSpec((pkH, pkH), lambda i: (0, 0)),   # W2p
            pl.BlockSpec((1, pkH), lambda i: (0, 0)),     # b2p
        ],
        out_specs=pl.BlockSpec((tbp, pkH), lambda i: (i, 0)),
        compiler_params=pltpu.CompilerParams(
            dimension_semantics=("parallel",),
        ),
        cost_estimate=pl.CostEstimate(
            flops=2 * Bp * H * (D_in + H),
            transcendentals=0,
            bytes_accessed=4 * (Bp * D_in + Bp * H + H * D_in + H * H + 2 * H),
        ),
    )(x_packed, w1p, b1p, w2p, b2p)

    out = out_packed.reshape(Bp, H)                # metadata-only
    if Bp != B:
        out = out[:B]                              # only pays a copy for ragged B
    return out


def init_params(key, input_dim=1, hidden_dim=32):
    """PyTorch nn.Linear default init (uniform +/- 1/sqrt(fan_in)), native layout."""
    k1, k2, k3, k4 = jax.random.split(key, 4)
    bound1 = 1.0 / math.sqrt(input_dim)
    bound2 = 1.0 / math.sqrt(hidden_dim)
    w1 = jax.random.uniform(k1, (hidden_dim, input_dim), jnp.float32, -bound1, bound1)
    b1 = jax.random.uniform(k2, (hidden_dim,), jnp.float32, -bound1, bound1)
    w2 = jax.random.uniform(k3, (hidden_dim, hidden_dim), jnp.float32, -bound2, bound2)
    b2 = jax.random.uniform(k4, (hidden_dim,), jnp.float32, -bound2, bound2)
    return w1, b1, w2, b2


if __name__ == "__main__":
    key = jax.random.PRNGKey(0)
    kx1, kx2, kx3, kp = jax.random.split(key, 4)

    input_dim, hidden_dim = 1, 32
    w1, b1, w2, b2 = init_params(kp, input_dim, hidden_dim)

    # 1) Production-sized tiny batch (module's natural shape): fused-XLA fast path.
    x_small = jax.random.normal(kx1, (8, input_dim), jnp.float32)
    out_small = jax.block_until_ready(measurement_encoder(x_small, w1, b1, w2, b2))
    assert out_small.shape == (8, hidden_dim)
    assert jnp.allclose(out_small, _reference(x_small, w1, b1, w2, b2), atol=1e-5, rtol=1e-5)

    # 2) Large batch, evenly tiled: exercises the Pallas kernel (2+ grid blocks).
    x_big = jax.random.normal(kx2, (4096, input_dim), jnp.float32)
    out_big = jax.block_until_ready(measurement_encoder(x_big, w1, b1, w2, b2))
    assert out_big.shape == (4096, hidden_dim)
    assert jnp.allclose(out_big, _reference(x_big, w1, b1, w2, b2), atol=1e-5, rtol=1e-5)

    # 3) Ragged batch: exercises the small pad + masked partial last grid block.
    x_rag = jax.random.normal(kx3, (2500, input_dim), jnp.float32)
    out_rag = jax.block_until_ready(measurement_encoder(x_rag, w1, b1, w2, b2))
    assert out_rag.shape == (2500, hidden_dim)
    assert jnp.allclose(out_rag, _reference(x_rag, w1, b1, w2, b2), atol=1e-5, rtol=1e-5)

    print("KERNEL_OK")
</pallas_src>

<mosaic_0001>
module attributes {stable_mosaic.version = 11 : i64} {
  func.func @_mlp_kernel(%arg0: i32, %arg1: memref<512x4xf32, #tpu.memory_space<vmem>>, %arg2: memref<4x128xf32, #tpu.memory_space<vmem>>, %arg3: memref<1x128xf32, #tpu.memory_space<vmem>>, %arg4: memref<128x128xf32, #tpu.memory_space<vmem>>, %arg5: memref<1x128xf32, #tpu.memory_space<vmem>>, %arg6: memref<512x128xf32, #tpu.memory_space<vmem>>) attributes {dimension_semantics = [#tpu.dimension_semantics<parallel>], iteration_bounds = array<i64: 2>, scalar_prefetch = 0 : i64, scratch_operands = 0 : i64, tpu.core_type = #tpu.core_type<tc>, window_params = [{transform_indices = @transform_0, window_bounds = array<i64: 512, 4>}, {pipeline_mode = #tpu.pipeline_mode<synchronous>, transform_indices = @transform_1, window_bounds = array<i64: 4, 128>}, {pipeline_mode = #tpu.pipeline_mode<synchronous>, transform_indices = @transform_2, window_bounds = array<i64: 1, 128>}, {pipeline_mode = #tpu.pipeline_mode<synchronous>, transform_indices = @transform_3, window_bounds = array<i64: 128, 128>}, {pipeline_mode = #tpu.pipeline_mode<synchronous>, transform_indices = @transform_4, window_bounds = array<i64: 1, 128>}, {transform_indices = @transform_5, window_bounds = array<i64: 512, 128>}]} {
    %c0 = arith.constant 0 : index
    %c0_0 = arith.constant 0 : index
    %0 = vector.load %arg1[%c0, %c0_0] : memref<512x4xf32, #tpu.memory_space<vmem>>, vector<512x4xf32>
    %c0_1 = arith.constant 0 : index
    %c0_2 = arith.constant 0 : index
    %1 = vector.load %arg2[%c0_1, %c0_2] : memref<4x128xf32, #tpu.memory_space<vmem>>, vector<4x128xf32>
    %cst = arith.constant dense<0.000000e+00> : vector<512x128xf32>
    %2 = tpu.matmul %0, %1, %cst {dimension_numbers = #tpu.dot_dimension_numbers<[1], [0], [0], [1], [0, 0, 1, 1], [], []>} : vector<512x4xf32>, vector<4x128xf32>, vector<512x128xf32> -> vector<512x128xf32>
    %c0_3 = arith.constant 0 : index
    %c0_4 = arith.constant 0 : index
    %3 = vector.load %arg3[%c0_3, %c0_4] : memref<1x128xf32, #tpu.memory_space<vmem>>, vector<1x128xf32>
    %4 = vector.broadcast %3 : vector<1x128xf32> to vector<512x128xf32>
    %5 = arith.addf %2, %4 : vector<512x128xf32>
    %cst_5 = arith.constant 0.000000e+00 : f32
    %6 = vector.broadcast %cst_5 : f32 to vector<512x128xf32>
    %7 = arith.maximumf %5, %6 : vector<512x128xf32>
    %c0_6 = arith.constant 0 : index
    %c0_7 = arith.constant 0 : index
    %8 = vector.load %arg4[%c0_6, %c0_7] : memref<128x128xf32, #tpu.memory_space<vmem>>, vector<128x128xf32>
    %cst_8 = arith.constant dense<0.000000e+00> : vector<512x128xf32>
    %9 = tpu.matmul %7, %8, %cst_8 {dimension_numbers = #tpu.dot_dimension_numbers<[1], [0], [0], [1], [0, 0, 1, 1], [], []>} : vector<512x128xf32>, vector<128x128xf32>, vector<512x128xf32> -> vector<512x128xf32>
    %c0_9 = arith.constant 0 : index
    %c0_10 = arith.constant 0 : index
    %10 = vector.load %arg5[%c0_9, %c0_10] : memref<1x128xf32, #tpu.memory_space<vmem>>, vector<1x128xf32>
    %11 = vector.broadcast %10 : vector<1x128xf32> to vector<512x128xf32>
    %12 = arith.addf %9, %11 : vector<512x128xf32>
    %c0_11 = arith.constant 0 : index
    %c0_12 = arith.constant 0 : index
    %13 = vector.load %arg6[%c0_11, %c0_12] : memref<512x128xf32, #tpu.memory_space<vmem>>, vector<512x128xf32>
    tpu.vector_store %arg6[%c0_11, %c0_12], %12 {strides = array<i32>} : memref<512x128xf32, #tpu.memory_space<vmem>>, vector<512x128xf32>,
    return
  }
  func.func @transform_0(%arg0: i32) -> (i32, i32) {
    %c0_i32 = arith.constant 0 : i32
    %c0_i32_0 = arith.constant 0 : i32
    return %arg0, %c0_i32 : i32, i32
  }
  func.func @transform_1(%arg0: i32) -> (i32, i32) {
    %c0_i32 = arith.constant 0 : i32
    %c0_i32_0 = arith.constant 0 : i32
    %c0_i32_1 = arith.constant 0 : i32
    return %c0_i32, %c0_i32_0 : i32, i32
  }
  func.func @transform_2(%arg0: i32) -> (i32, i32) {
    %c0_i32 = arith.constant 0 : i32
    %c0_i32_0 = arith.constant 0 : i32
    %c0_i32_1 = arith.constant 0 : i32
    return %c0_i32, %c0_i32_0 : i32, i32
  }
  func.func @transform_3(%arg0: i32) -> (i32, i32) {
    %c0_i32 = arith.constant 0 : i32
    %c0_i32_0 = arith.constant 0 : i32
    %c0_i32_1 = arith.constant 0 : i32
    return %c0_i32, %c0_i32_0 : i32, i32
  }
  func.func @transform_4(%arg0: i32) -> (i32, i32) {
    %c0_i32 = arith.constant 0 : i32
    %c0_i32_0 = arith.constant 0 : i32
    %c0_i32_1 = arith.constant 0 : i32
    return %c0_i32, %c0_i32_0 : i32, i32
  }
  func.func @transform_5(%arg0: i32) -> (i32, i32) {
    %c0_i32 = arith.constant 0 : i32
    %c0_i32_0 = arith.constant 0 : i32
    return %arg0, %c0_i32 : i32, i32
  }
}

</mosaic_0001>

<llo_original>
// kernel: tpu_custom_call.1
$region0: #{tpu_custom_call.1}
  #allocation0 [shape = 'u32[]', space=smem, size = 0x4, offset = 0x4, fixed_abs, tag = 'smem constant byte address 0x4 - core index']
  #allocation1 [shape = 'u32[144,128]{1,0:T(1,128)}', space=vmem, size = 0x12000, scoped, tag = 'internal scratch']
  %s0 = inlined_call_operand.vmem [shape: f32[1024,4], index: 0, kind: input, shape index: {}]
  %s1 = inlined_call_operand.vmem [shape: f32[4,128], index: 1, kind: input, shape index: {}]
  %s2 = inlined_call_operand.vmem [shape: f32[1,128], index: 2, kind: input, shape index: {}]
  %s3 = inlined_call_operand.vmem [shape: f32[128,128], index: 3, kind: input, shape index: {}]
  %s4 = inlined_call_operand.vmem [shape: f32[1,128], index: 4, kind: input, shape index: {}]
  %s5 = inlined_call_operand.hbm [shape: f32[1024,128], index: 5, kind: output, shape index: {}]
  %s6 = sld [smem:[#allocation0]]
  $region53: #{tpu_custom_call.1} parent=0
    _
  %s8 = ssub.s32 1, %s6
  %s9 = scalar_select 0, %s8, %s6
  $region1: #{tpu_custom_call.1} parent=0
    #allocation2 [shape = 'u8[524288]{0}', space=vmem, size = 0x80000, scoped, tag = 'output window, operand 0']
    #allocation3 [shape = 's32[2]{0}', space=sflag, size = 0x8, scoped, tag = 'scoped memory for tpu_custom_call.1']
    %10 = vsyncpa [#allocation3], 0
    %s11 = scalar_lea.sflag [#allocation3], 1
    %12 = vsyncpa %s11, 0
    loop: start=0, step=1, limit=4
    $region2: #{tpu_custom_call.1} parent=1 // loop_pre_header
      _
    $region3: #{tpu_custom_call.1} parent=1 // loop_header
      %s14 = sphi 0, %s18
      %p15 = scmp.ge.s32.totalorder %s14, 4
      %s24 = sphi 0, %s26
      %s27 = sphi 0, %s24
      %s28 = sphi 0, %s27
      %s44 = sphi 0, %s28
      %s48 = sphi 0, %s48
      %s50 = sphi 0, %s48
      %s51 = sphi 0, %s50
      %s65 = sphi 0, %s51
      %s69 = sphi 0, %s69
      %s71 = sphi 0, %s69
      %s72 = sphi 0, %s71
      %s86 = sphi 0, %s72
      %s90 = sphi 0, %s90
      %s92 = sphi 0, %s90
      %s93 = sphi 0, %s92
      %s107 = sphi 0, %s93
      %s111 = sphi 0, %s111
      %s113 = sphi 0, %s111
      %s114 = sphi 0, %s113
      %s128 = sphi 0, %s114
      %s134 = sphi 0, %s136
      %s137 = sphi 0, %s134
      %s138 = sphi 0, %s137
      %s154 = sphi 0, %s138
    $region4: #{tpu_custom_call.1} parent=1 // loop_header_branch
      %17 = sbr.rel (%p15) target = $region8
    $region5: #{tpu_custom_call.1} parent=1 // loop_body
      %s19 = ssub.s32 %s14, 1
      %s20 = ssub.s32 %s14, 2
      %s21 = sadd.s32 %s14, 1
      %s22 = ssub.s32 %s14, %s21
      %p23 = scmp.eq.s32.totalorder %s22, 0
      %s25 = sadd.s32 %s24, 1
      %s26 = scalar_select %p23, %s24, %s25
      %p29 = pneg %p23
      %p30 = scmp.eq.s32.totalorder %s14, 1
      %p31 = por %p29, %p30
      %p32 = scmp.ne.s32.totalorder %s24, %s27
      %p33 = scmp.eq.s32.totalorder %s14, 0
      %p34 = por %p32, %p33
      %p35 = scmp.ne.s32.totalorder %s24, %s27
      %p36 = scmp.eq.s32.totalorder %s19, 1
      %p37 = por %p35, %p36
      %p38 = scmp.ne.s32.totalorder %s27, %s28
      %p39 = scmp.eq.s32.totalorder %s19, 0
      %p40 = por %p38, %p39
      %p41 = scmp.ne.s32.totalorder %s27, %s28
      %p42 = scmp.eq.s32.totalorder %s20, 1
      %p43 = por %p41, %p42
      %p45 = scmp.ne.s32.totalorder %s28, %s44
      %p46 = scmp.eq.s32.totalorder %s20, 0
      %p47 = por %p45, %p46
      %s49 = sadd.s32 %s48, 1
      %p52 = scmp.eq.s32.totalorder %s14, 1
      %p53 = scmp.ne.s32.totalorder %s48, %s50
      %p54 = scmp.eq.s32.totalorder %s14, 0
      %p55 = por %p53, %p54
      %p56 = scmp.ne.s32.totalorder %s48, %s50
      %p57 = scmp.eq.s32.totalorder %s19, 1
      %p58 = por %p56, %p57
      %p59 = scmp.ne.s32.totalorder %s50, %s51
      %p60 = scmp.eq.s32.totalorder %s19, 0
      %p61 = por %p59, %p60
      %p62 = scmp.ne.s32.totalorder %s50, %s51
      %p63 = scmp.eq.s32.totalorder %s20, 1
      %p64 = por %p62, %p63
      %p66 = scmp.ne.s32.totalorder %s51, %s65
      %p67 = scmp.eq.s32.totalorder %s20, 0
      %p68 = por %p66, %p67
      %s70 = sadd.s32 %s69, 1
      %p73 = scmp.eq.s32.totalorder %s14, 1
      %p74 = scmp.ne.s32.totalorder %s69, %s71
      %p75 = scmp.eq.s32.totalorder %s14, 0
      %p76 = por %p74, %p75
      %p77 = scmp.ne.s32.totalorder %s69, %s71
      %p78 = scmp.eq.s32.totalorder %s19, 1
      %p79 = por %p77, %p78
      %p80 = scmp.ne.s32.totalorder %s71, %s72
      %p81 = scmp.eq.s32.totalorder %s19, 0
      %p82 = por %p80, %p81
      %p83 = scmp.ne.s32.totalorder %s71, %s72
      %p84 = scmp.eq.s32.totalorder %s20, 1
      %p85 = por %p83, %p84
      %p87 = scmp.ne.s32.totalorder %s72, %s86
      %p88 = scmp.eq.s32.totalorder %s20, 0
      %p89 = por %p87, %p88
      %s91 = sadd.s32 %s90, 1
      %p94 = scmp.eq.s32.totalorder %s14, 1
      %p95 = scmp.ne.s32.totalorder %s90, %s92
      %p96 = scmp.eq.s32.totalorder %s14, 0
      %p97 = por %p95, %p96
      %p98 = scmp.ne.s32.totalorder %s90, %s92
      %p99 = scmp.eq.s32.totalorder %s19, 1
      %p100 = por %p98, %p99
      %p101 = scmp.ne.s32.totalorder %s92, %s93
      %p102 = scmp.eq.s32.totalorder %s19, 0
      %p103 = por %p101, %p102
      %p104 = scmp.ne.s32.totalorder %s92, %s93
      %p105 = scmp.eq.s32.totalorder %s20, 1
      %p106 = por %p104, %p105
      %p108 = scmp.ne.s32.totalorder %s93, %s107
      %p109 = scmp.eq.s32.totalorder %s20, 0
      %p110 = por %p108, %p109
      %s112 = sadd.s32 %s111, 1
      %p115 = scmp.eq.s32.totalorder %s14, 1
      %p116 = scmp.ne.s32.totalorder %s111, %s113
      %p117 = scmp.eq.s32.totalorder %s14, 0
      %p118 = por %p116, %p117
      %p119 = scmp.ne.s32.totalorder %s111, %s113
      %p120 = scmp.eq.s32.totalorder %s19, 1
      %p121 = por %p119, %p120
      %p122 = scmp.ne.s32.totalorder %s113, %s114
      %p123 = scmp.eq.s32.totalorder %s19, 0
      %p124 = por %p122, %p123
      %p125 = scmp.ne.s32.totalorder %s113, %s114
      %p126 = scmp.eq.s32.totalorder %s20, 1
      %p127 = por %p125, %p126
      %p129 = scmp.ne.s32.totalorder %s114, %s128
      %p130 = scmp.eq.s32.totalorder %s20, 0
      %p131 = por %p129, %p130
      %s132 = ssub.s32 %s14, %s21
      %p133 = scmp.eq.s32.totalorder %s132, 0
      %s135 = sadd.s32 %s134, 1
      %s136 = scalar_select %p133, %s134, %s135
      %p139 = pneg %p133
      %p140 = scmp.eq.s32.totalorder %s14, 1
      %p141 = por %p139, %p140
      %p142 = scmp.ne.s32.totalorder %s134, %s137
      %p143 = scmp.eq.s32.totalorder %s14, 0
      %p144 = por %p142, %p143
      %p145 = scmp.ne.s32.totalorder %s134, %s137
      %p146 = scmp.eq.s32.totalorder %s19, 1
      %p147 = por %p145, %p146
      %p148 = scmp.ne.s32.totalorder %s137, %s138
      %p149 = scmp.eq.s32.totalorder %s19, 0
      %p150 = por %p148, %p149
      %p151 = scmp.ne.s32.totalorder %s137, %s138
      %p152 = scmp.eq.s32.totalorder %s20, 1
      %p153 = por %p151, %p152
      %p155 = scmp.ne.s32.totalorder %s138, %s154
      %p156 = scmp.eq.s32.totalorder %s20, 0
      %p157 = por %p155, %p156
      %p158 = scmp.le.s32.totalorder 1, %s14
      %p159 = scmp.lt.s32.totalorder %s14, 3
      %p160 = pnand %p158, %p159
      %p161 = pneg %p160
      // Predicated region
      $region9: #{tpu_custom_call.1} parent=5 // pred_check
        _
      $region10: #{tpu_custom_call.1} parent=5 // pred_check_branch
        %163 = sbr.rel (%p160) target = $region12
      $region11: #{tpu_custom_call.1} parent=5 // pred_region
        %s164 = ssub.s32 %s14, 1
        // Predicated region
        $region13: #{tpu_custom_call.1} parent=11 // pred_check
          %p165 = pneg %p61
        $region14: #{tpu_custom_call.1} parent=11 // pred_check_branch
          %167 = sbr.rel (%p165) target = $region16
        $region15: #{tpu_custom_call.1} parent=11 // pred_region
          _
        $region16: #{tpu_custom_call.1} parent=11 // pred_fallthru
          _
        // Predicated region
        $region17: #{tpu_custom_call.1} parent=11 // pred_check
          %p168 = pneg %p82
        $region18: #{tpu_custom_call.1} parent=11 // pred_check_branch
          %170 = sbr.rel (%p168) target = $region20
        $region19: #{tpu_custom_call.1} parent=11 // pred_region
          _
        $region20: #{tpu_custom_call.1} parent=11 // pred_fallthru
          _
        // Predicated region
        $region21: #{tpu_custom_call.1} parent=11 // pred_check
          %p171 = pneg %p103
        $region22: #{tpu_custom_call.1} parent=11 // pred_check_branch
          %173 = sbr.rel (%p171) target = $region24
        $region23: #{tpu_custom_call.1} parent=11 // pred_region
          _
        $region24: #{tpu_custom_call.1} parent=11 // pred_fallthru
          _
        // Predicated region
        $region25: #{tpu_custom_call.1} parent=11 // pred_check
          %p174 = pneg %p124
        $region26: #{tpu_custom_call.1} parent=11 // pred_check_branch
          %176 = sbr.rel (%p174) target = $region28
        $region27: #{tpu_custom_call.1} parent=11 // pred_region
          _
        $region28: #{tpu_custom_call.1} parent=11 // pred_fallthru
          _
      $region12: #{tpu_custom_call.1} parent=5 // pred_fallthru
        _
      %p177 = scmp.lt.s32.totalorder %s14, 2
      // Predicated region
      $region29: #{tpu_custom_call.1} parent=5 // pred_check
        %p178 = pneg %p177
      $region30: #{tpu_custom_call.1} parent=5 // pred_check_branch
        %180 = sbr.rel (%p178) target = $region32
      $region31: #{tpu_custom_call.1} parent=5 // pred_region
        // Predicated region
        $region33: #{tpu_custom_call.1} parent=31 // pred_check
          %p181 = pneg %p34
        $region34: #{tpu_custom_call.1} parent=31 // pred_check_branch
          %183 = sbr.rel (%p181) target = $region36
        $region35: #{tpu_custom_call.1} parent=31 // pred_region
          %s184 = smul.u32 64, %s14
          %p185 = scmp.lt.s32.totalorder %s184, 127
          %s186 = scalar_select %p185, %s184, 127
          %s187 = smul.addr %s186, 8
          %s188 = scalar_lea.vmem %s0, %s187
          %s189 = smul.u32 64, %s14
        $region36: #{tpu_custom_call.1} parent=31 // pred_fallthru
          _
      $region32: #{tpu_custom_call.1} parent=5 // pred_fallthru
        _
      %p190 = scmp.le.s32.totalorder 1, %s14
      %p191 = scmp.lt.s32.totalorder %s14, 3
      %p192 = pnand %p190, %p191
      %p193 = pneg %p192
      // Predicated region
      $region37: #{tpu_custom_call.1} parent=5 // pred_check
        _
      $region38: #{tpu_custom_call.1} parent=5 // pred_check_branch
        %195 = sbr.rel (%p192) target = $region40
      $region39: #{tpu_custom_call.1} parent=5 // pred_region
        %s196 = ssub.s32 %s14, 1
        %s197 = smul.u32 64, %s19
        %p198 = scmp.lt.s32.totalorder %s197, 127
        %s199 = scalar_select %p198, %s197, 127
        %s200 = smul.addr %s199, 8
        %s201 = scalar_lea.vmem %s0, %s200
        %p202 = pneg %p40
        %p203 = pneg %p37
        %p204 = pneg %p61
        %p205 = pneg %p58
        %p206 = pneg %p82
        %p207 = pneg %p79
        %p208 = pneg %p103
        %p209 = pneg %p100
        %p210 = pneg %p124
        %p211 = pneg %p121
        %p212 = pneg %p150
        %p213 = pneg %p147
        %s214 = sand.u32 %s137, 1
        %s215 = scalar_lea.sflag [#allocation3], %s214
        %s216 = sand.u32 %s137, 1
        %s217 = smul.addr %s216, 512
        %s218 = scalar_lea.vmem [#allocation2], %s217
        %s219 = smul.u32 64, %s19
        %p220 = scmp.lt.s32.totalorder %s219, 127
        %s221 = scalar_select %p220, %s219, 127
        %s222 = smul.addr %s221, 8
        %s223 = scalar_lea.vmem %s0, %s222
        %s224 = smul.u32 64, %s19
        %s225 = smul.u32 64, %s19
        %v226 = vld [vmem:[%s223] sm:$0xff]
        %v227 = vld [vmem:[%s223 + $0x8] sm:$0xff]
        %v228 = vld [vmem:[%s223 + $0x10] sm:$0xff]
        %v229 = vld [vmem:[%s223 + $0x18] sm:$0xff]
        %v230 = vld [vmem:[%s223 + $0x20] sm:$0xff]
        %v231 = vld [vmem:[%s223 + $0x28] sm:$0xff]
        %v232 = vld [vmem:[%s223 + $0x30] sm:$0xff]
        %v233 = vld [vmem:[%s223 + $0x38] sm:$0xff]
        %v234 = vld [vmem:[%s223 + $0x40] sm:$0xff]
        %v235 = vld [vmem:[%s223 + $0x48] sm:$0xff]
        %v236 = vld [vmem:[%s223 + $0x50] sm:$0xff]
        %v237 = vld [vmem:[%s223 + $0x58] sm:$0xff]
        %v238 = vld [vmem:[%s223 + $0x60] sm:$0xff]
        %v239 = vld [vmem:[%s223 + $0x68] sm:$0xff]
        %v240 = vld [vmem:[%s223 + $0x70] sm:$0xff]
        %v241 = vld [vmem:[%s223 + $0x78] sm:$0xff]
        %v242 = vld [vmem:[%s223 + $0x80] sm:$0xff]
        %v243 = vld [vmem:[%s223 + $0x88] sm:$0xff]
        %v244 = vld [vmem:[%s223 + $0x90] sm:$0xff]
        %v245 = vld [vmem:[%s223 + $0x98] sm:$0xff]
        %v246 = vld [vmem:[%s223 + $0xa0] sm:$0xff]
        %v247 = vld [vmem:[%s223 + $0xa8] sm:$0xff]
        %v248 = vld [vmem:[%s223 + $0xb0] sm:$0xff]
        %v249 = vld [vmem:[%s223 + $0xb8] sm:$0xff]
        %v250 = vld [vmem:[%s223 + $0xc0] sm:$0xff]
        %v251 = vld [vmem:[%s223 + $0xc8] sm:$0xff]
        %v252 = vld [vmem:[%s223 + $0xd0] sm:$0xff]
        %v253 = vld [vmem:[%s223 + $0xd8] sm:$0xff]
        %v254 = vld [vmem:[%s223 + $0xe0] sm:$0xff]
        %v255 = vld [vmem:[%s223 + $0xe8] sm:$0xff]
        %v256 = vld [vmem:[%s223 + $0xf0] sm:$0xff]
        %v257 = vld [vmem:[%s223 + $0xf8] sm:$0xff]
        %v258 = vld [vmem:[%s223 + $0x100] sm:$0xff]
        %v259 = vld [vmem:[%s223 + $0x108] sm:$0xff]
        %v260 = vld [vmem:[%s223 + $0x110] sm:$0xff]
        %v261 = vld [vmem:[%s223 + $0x118] sm:$0xff]
        %v262 = vld [vmem:[%s223 + $0x120] sm:$0xff]
        %v263 = vld [vmem:[%s223 + $0x128] sm:$0xff]
        %v264 = vld [vmem:[%s223 + $0x130] sm:$0xff]
        %v265 = vld [vmem:[%s223 + $0x138] sm:$0xff]
        %v266 = vld [vmem:[%s223 + $0x140] sm:$0xff]
        %v267 = vld [vmem:[%s223 + $0x148] sm:$0xff]
        %v268 = vld [vmem:[%s223 + $0x150] sm:$0xff]
        %v269 = vld [vmem:[%s223 + $0x158] sm:$0xff]
        %v270 = vld [vmem:[%s223 + $0x160] sm:$0xff]
        %v271 = vld [vmem:[%s223 + $0x168] sm:$0xff]
        %v272 = vld [vmem:[%s223 + $0x170] sm:$0xff]
        %v273 = vld [vmem:[%s223 + $0x178] sm:$0xff]
        %v274 = vld [vmem:[%s223 + $0x180] sm:$0xff]
        %v275 = vld [vmem:[%s223 + $0x188] sm:$0xff]
        %v276 = vld [vmem:[%s223 + $0x190] sm:$0xff]
        %v277 = vld [vmem:[%s223 + $0x198] sm:$0xff]
        %v278 = vld [vmem:[%s223 + $0x1a0] sm:$0xff]
        %v279 = vld [vmem:[%s223 + $0x1a8] sm:$0xff]
        %v280 = vld [vmem:[%s223 + $0x1b0] sm:$0xff]
        %v281 = vld [vmem:[%s223 + $0x1b8] sm:$0xff]
        %v282 = vld [vmem:[%s223 + $0x1c0] sm:$0xff]
        %v283 = vld [vmem:[%s223 + $0x1c8] sm:$0xff]
        %v284 = vld [vmem:[%s223 + $0x1d0] sm:$0xff]
        %v285 = vld [vmem:[%s223 + $0x1d8] sm:$0xff]
        %v286 = vld [vmem:[%s223 + $0x1e0] sm:$0xff]
        %v287 = vld [vmem:[%s223 + $0x1e8] sm:$0xff]
        %v288 = vld [vmem:[%s223 + $0x1f0] sm:$0xff]
        %v289 = vld [vmem:[%s223 + $0x1f8] sm:$0xff]
        %v290 = vld [vmem:[%s1] sm:$0xf]
        %v291 = vld [vmem:[%s2] sm:$0x1]
        %v293 = vlaneseq
        %v294 = vshrl.u32 %v293, 7
        %v295 = vsub.s32 0, %v294
        %v296 = vrot.slane %v291, %v295
        %vm298 = vcmask 31744
        %v300 = vsel %vm298, %v226, 0
        %v303 = vsel %vm298, %v227, 0
        %v306 = vsel %vm298, %v228, 0
        %v309 = vsel %vm298, %v229, 0
        %v312 = vsel %vm298, %v230, 0
        %v315 = vsel %vm298, %v231, 0
        %v318 = vsel %vm298, %v232, 0
        %v321 = vsel %vm298, %v233, 0
        %v324 = vsel %vm298, %v234, 0
        %v327 = vsel %vm298, %v235, 0
        %v330 = vsel %vm298, %v236, 0
        %v333 = vsel %vm298, %v237, 0
        %v336 = vsel %vm298, %v238, 0
        %v339 = vsel %vm298, %v239, 0
        %v342 = vsel %vm298, %v240, 0
        %v345 = vsel %vm298, %v241, 0
        %v348 = vsel %vm298, %v242, 0
        %v351 = vsel %vm298, %v243, 0
        %v354 = vsel %vm298, %v244, 0
        %v357 = vsel %vm298, %v245, 0
        %v360 = vsel %vm298, %v246, 0
        %v363 = vsel %vm298, %v247, 0
        %v366 = vsel %vm298, %v248, 0
        %v369 = vsel %vm298, %v249, 0
        %v372 = vsel %vm298, %v250, 0
        %v375 = vsel %vm298, %v251, 0
        %v378 = vsel %vm298, %v252, 0
        %v381 = vsel %vm298, %v253, 0
        %v384 = vsel %vm298, %v254, 0
        %v387 = vsel %vm298, %v255, 0
        %v390 = vsel %vm298, %v256, 0
        %v393 = vsel %vm298, %v257, 0
        %v396 = vsel %vm298, %v258, 0
        %v399 = vsel %vm298, %v259, 0
        %v402 = vsel %vm298, %v260, 0
        %v405 = vsel %vm298, %v261, 0
        %v408 = vsel %vm298, %v262, 0
        %v411 = vsel %vm298, %v263, 0
        %v414 = vsel %vm298, %v264, 0
        %v417 = vsel %vm298, %v265, 0
        %v420 = vsel %vm298, %v266, 0
        %v423 = vsel %vm298, %v267, 0
        %v426 = vsel %vm298, %v268, 0
        %v429 = vsel %vm298, %v269, 0
        %v432 = vsel %vm298, %v270, 0
        %v435 = vsel %vm298, %v271, 0
        %v438 = vsel %vm298, %v272, 0
        %v441 = vsel %vm298, %v273, 0
        %v444 = vsel %vm298, %v274, 0
        %v447 = vsel %vm298, %v275, 0
        %v450 = vsel %vm298, %v276, 0
        %v453 = vsel %vm298, %v277, 0
        %v456 = vsel %vm298, %v278, 0
        %v459 = vsel %vm298, %v279, 0
        %v462 = vsel %vm298, %v280, 0
        %v465 = vsel %vm298, %v281, 0
        %v468 = vsel %vm298, %v282, 0
        %v471 = vsel %vm298, %v283, 0
        %v474 = vsel %vm298, %v284, 0
        %v477 = vsel %vm298, %v285, 0
        %v480 = vsel %vm298, %v286, 0
        %v483 = vsel %vm298, %v287, 0
        %v486 = vsel %vm298, %v288, 0
        %v489 = vsel %vm298, %v289, 0
        %vm491 = vcmask 1043456
        %v493 = vsel %vm491, %v290, 0
        %495 = vmatprep.subr.mxu0 0.0
        %496 = vmatpush1.msra.mxu0 0.0
        %497 = vmatprep.subr.mxu0 0.0
        %498 = vmatpush1.msra.mxu0 0.0
        %499 = vmatprep.subr.mxu0 0.0
        %500 = vmatpush1.msra.mxu0 0.0
        %501 = vmatprep.subr.mxu0 0.0
        %502 = vmatpush1.msra.mxu0 0.0
        %503 = vmatprep.subr.mxu0 0.0
        %504 = vmatpush1.msra.mxu0 0.0
        %505 = vmatprep.subr.mxu0 0.0
        %506 = vmatpush1.msra.mxu0 0.0
        %507 = vmatprep.subr.mxu0 0.0
        %508 = vmatpush1.msra.mxu0 0.0
        %509 = vmatprep.subr.mxu0 0.0
        %510 = vmatpush1.msra.mxu0 0.0
        %511 = vmatprep.subr.mxu0 0.0
        %512 = vmatpush1.msra.mxu0 0.0
        %513 = vmatprep.subr.mxu0 0.0
        %514 = vmatpush1.msra.mxu0 0.0
        %515 = vmatprep.subr.mxu0 0.0
        %516 = vmatpush1.msra.mxu0 0.0
        %517 = vmatprep.subr.mxu0 0.0
        %518 = vmatpush1.msra.mxu0 0.0
        %519 = vmatprep.subr.mxu0 0.0
        %520 = vmatpush1.msra.mxu0 0.0
        %521 = vmatprep.subr.mxu0 0.0
        %522 = vmatpush1.msra.mxu0 0.0
        %523 = vmatprep.subr.mxu0 0.0
        %524 = vmatpush1.msra.mxu0 0.0
        %525 = vmatprep.subr.mxu0 0.0
        %526 = vmatpush1.msra.mxu0 %v493
        %527 = vmatprep.subr.mxu0 0.0
        %528 = vmatpush2.msra.mxu0 0.0
        %529 = vmatprep.subr.mxu0 0.0
        %530 = vmatpush2.msra.mxu0 0.0
        %531 = vmatprep.subr.mxu0 0.0
        %532 = vmatpush2.msra.mxu0 0.0
        %533 = vmatprep.subr.mxu0 0.0
        %534 = vmatpush2.msra.mxu0 0.0
        %535 = vmatprep.subr.mxu0 0.0
        %536 = vmatpush2.msra.mxu0 0.0
        %537 = vmatprep.subr.mxu0 0.0
        %538 = vmatpush2.msra.mxu0 0.0
        %539 = vmatprep.subr.mxu0 0.0
        %540 = vmatpush2.msra.mxu0 0.0
        %541 = vmatprep.subr.mxu0 0.0
        %542 = vmatpush2.msra.mxu0 0.0
        %543 = vmatprep.subr.mxu0 0.0
        %544 = vmatpush2.msra.mxu0 0.0
        %545 = vmatprep.subr.mxu0 0.0
        %546 = vmatpush2.msra.mxu0 0.0
        %547 = vmatprep.subr.mxu0 0.0
        %548 = vmatpush2.msra.mxu0 0.0
        %549 = vmatprep.subr.mxu0 0.0
        %550 = vmatpush2.msra.mxu0 0.0
        %551 = vmatprep.subr.mxu0 0.0
        %552 = vmatpush2.msra.mxu0 0.0
        %553 = vmatprep.subr.mxu0 0.0
        %554 = vmatpush2.msra.mxu0 0.0
        %555 = vmatprep.subr.mxu0 0.0
        %556 = vmatpush2.msra.mxu0 0.0
        %557 = vmatprep.subr.mxu0 0.0
        %558 = vmatpush2.msra.mxu0 0.0
        %559 = vmatprep.mubr.f32.mxu0 0.0
        %560 = vmatmul.mubr.f32.gmra.mxu0 %v300
        %v561 = vpop.f32.mrf.mxu0
        %v562 = vadd.f32 %v296, %v561
        %v563 = vpop.f32.mrf.mxu0
        %564 = vmatprep.mubr.f32.mxu0 0.0
        %565 = vmatmul.mubr.f32.gmra.mxu0 %v303
        %v566 = vpop.f32.mrf.mxu0
        %v567 = vadd.f32 %v296, %v566
        %v568 = vpop.f32.mrf.mxu0
        %569 = vmatprep.mubr.f32.mxu0 0.0
        %570 = vmatmul.mubr.f32.gmra.mxu0 %v306
        %v571 = vpop.f32.mrf.mxu0
        %v572 = vadd.f32 %v296, %v571
        %v573 = vpop.f32.mrf.mxu0
        %574 = vmatprep.mubr.f32.mxu0 0.0
        %575 = vmatmul.mubr.f32.gmra.mxu0 %v309
        %v576 = vpop.f32.mrf.mxu0
        %v577 = vadd.f32 %v296, %v576
        %v578 = vpop.f32.mrf.mxu0
        %579 = vmatprep.mubr.f32.mxu0 0.0
        %580 = vmatmul.mubr.f32.gmra.mxu0 %v312
        %v581 = vpop.f32.mrf.mxu0
        %v582 = vadd.f32 %v296, %v581
        %v583 = vpop.f32.mrf.mxu0
        %584 = vmatprep.mubr.f32.mxu0 0.0
        %585 = vmatmul.mubr.f32.gmra.mxu0 %v315
        %v586 = vpop.f32.mrf.mxu0
        %v587 = vadd.f32 %v296, %v586
        %v588 = vpop.f32.mrf.mxu0
        %589 = vmatprep.mubr.f32.mxu0 0.0
        %590 = vmatmul.mubr.f32.gmra.mxu0 %v318
        %v591 = vpop.f32.mrf.mxu0
        %v592 = vadd.f32 %v296, %v591
        %v593 = vpop.f32.mrf.mxu0
        %594 = vmatprep.mubr.f32.mxu0 0.0
        %595 = vmatmul.mubr.f32.gmra.mxu0 %v321
        %v596 = vpop.f32.mrf.mxu0
        %v597 = vadd.f32 %v296, %v596
        %v598 = vpop.f32.mrf.mxu0
        %599 = vmatprep.mubr.f32.mxu0 0.0
        %600 = vmatmul.mubr.f32.gmra.mxu0 %v324
        %v601 = vpop.f32.mrf.mxu0
        %v602 = vadd.f32 %v296, %v601
        %v603 = vpop.f32.mrf.mxu0
        %604 = vmatprep.mubr.f32.mxu0 0.0
        %605 = vmatmul.mubr.f32.gmra.mxu0 %v327
        %v606 = vpop.f32.mrf.mxu0
        %v607 = vadd.f32 %v296, %v606
        %v608 = vpop.f32.mrf.mxu0
        %609 = vmatprep.mubr.f32.mxu0 0.0
        %610 = vmatmul.mubr.f32.gmra.mxu0 %v330
        %v611 = vpop.f32.mrf.mxu0
        %v612 = vadd.f32 %v296, %v611
        %v613 = vpop.f32.mrf.mxu0
        %614 = vmatprep.mubr.f32.mxu0 0.0
        %615 = vmatmul.mubr.f32.gmra.mxu0 %v333
        %v616 = vpop.f32.mrf.mxu0
        %v617 = vadd.f32 %v296, %v616
        %v618 = vpop.f32.mrf.mxu0
        %619 = vmatprep.mubr.f32.mxu0 0.0
        %620 = vmatmul.mubr.f32.gmra.mxu0 %v336
        %v621 = vpop.f32.mrf.mxu0
        %v622 = vadd.f32 %v296, %v621
        %v623 = vpop.f32.mrf.mxu0
        %624 = vmatprep.mubr.f32.mxu0 0.0
        %625 = vmatmul.mubr.f32.gmra.mxu0 %v339
        %v626 = vpop.f32.mrf.mxu0
        %v627 = vadd.f32 %v296, %v626
        %v628 = vpop.f32.mrf.mxu0
        %629 = vmatprep.mubr.f32.mxu0 0.0
        %630 = vmatmul.mubr.f32.gmra.mxu0 %v342
        %v631 = vpop.f32.mrf.mxu0
        %v632 = vadd.f32 %v296, %v631
        %v633 = vpop.f32.mrf.mxu0
        %634 = vmatprep.mubr.f32.mxu0 0.0
        %635 = vmatmul.mubr.f32.gmra.mxu0 %v345
        %v636 = vpop.f32.mrf.mxu0
        %v637 = vadd.f32 %v296, %v636
        %v638 = vpop.f32.mrf.mxu0
        %639 = vmatprep.mubr.f32.mxu0 0.0
        %640 = vmatmul.mubr.f32.gmra.mxu0 %v348
        %v641 = vpop.f32.mrf.mxu0
        %v642 = vadd.f32 %v296, %v641
        %v643 = vpop.f32.mrf.mxu0
        %644 = vmatprep.mubr.f32.mxu0 0.0
        %645 = vmatmul.mubr.f32.gmra.mxu0 %v351
        %v646 = vpop.f32.mrf.mxu0
        %v647 = vadd.f32 %v296, %v646
        %v648 = vpop.f32.mrf.mxu0
        %649 = vmatprep.mubr.f32.mxu0 0.0
        %650 = vmatmul.mubr.f32.gmra.mxu0 %v354
        %v651 = vpop.f32.mrf.mxu0
        %v652 = vadd.f32 %v296, %v651
        %v653 = vpop.f32.mrf.mxu0
        %654 = vmatprep.mubr.f32.mxu0 0.0
        %655 = vmatmul.mubr.f32.gmra.mxu0 %v357
        %v656 = vpop.f32.mrf.mxu0
        %v657 = vadd.f32 %v296, %v656
        %v658 = vpop.f32.mrf.mxu0
        %659 = vmatprep.mubr.f32.mxu0 0.0
        %660 = vmatmul.mubr.f32.gmra.mxu0 %v360
        %v661 = vpop.f32.mrf.mxu0
        %v662 = vadd.f32 %v296, %v661
        %v663 = vpop.f32.mrf.mxu0
        %664 = vmatprep.mubr.f32.mxu0 0.0
        %665 = vmatmul.mubr.f32.gmra.mxu0 %v363
        %v666 = vpop.f32.mrf.mxu0
        %v667 = vadd.f32 %v296, %v666
        %v668 = vpop.f32.mrf.mxu0
        %669 = vmatprep.mubr.f32.mxu0 0.0
        %670 = vmatmul.mubr.f32.gmra.mxu0 %v366
        %v671 = vpop.f32.mrf.mxu0
        %v672 = vadd.f32 %v296, %v671
        %v673 = vpop.f32.mrf.mxu0
        %674 = vmatprep.mubr.f32.mxu0 0.0
        %675 = vmatmul.mubr.f32.gmra.mxu0 %v369
        %v676 = vpop.f32.mrf.mxu0
        %v677 = vadd.f32 %v296, %v676
        %v678 = vpop.f32.mrf.mxu0
        %679 = vmatprep.mubr.f32.mxu0 0.0
        %680 = vmatmul.mubr.f32.gmra.mxu0 %v372
        %v681 = vpop.f32.mrf.mxu0
        %v682 = vadd.f32 %v296, %v681
        %v683 = vpop.f32.mrf.mxu0
        %684 = vmatprep.mubr.f32.mxu0 0.0
        %685 = vmatmul.mubr.f32.gmra.mxu0 %v375
        %v686 = vpop.f32.mrf.mxu0
        %v687 = vadd.f32 %v296, %v686
        %v688 = vpop.f32.mrf.mxu0
        %689 = vmatprep.mubr.f32.mxu0 0.0
        %690 = vmatmul.mubr.f32.gmra.mxu0 %v378
        %v691 = vpop.f32.mrf.mxu0
        %v692 = vadd.f32 %v296, %v691
        %v693 = vpop.f32.mrf.mxu0
        %694 = vmatprep.mubr.f32.mxu0 0.0
        %695 = vmatmul.mubr.f32.gmra.mxu0 %v381
        %v696 = vpop.f32.mrf.mxu0
        %v697 = vadd.f32 %v296, %v696
        %v698 = vpop.f32.mrf.mxu0
        %699 = vmatprep.mubr.f32.mxu0 0.0
        %700 = vmatmul.mubr.f32.gmra.mxu0 %v384
        %v701 = vpop.f32.mrf.mxu0
        %v702 = vadd.f32 %v296, %v701
        %v703 = vpop.f32.mrf.mxu0
        %704 = vmatprep.mubr.f32.mxu0 0.0
        %705 = vmatmul.mubr.f32.gmra.mxu0 %v387
        %v706 = vpop.f32.mrf.mxu0
        %v707 = vadd.f32 %v296, %v706
        %v708 = vpop.f32.mrf.mxu0
        %709 = vmatprep.mubr.f32.mxu0 0.0
        %710 = vmatmul.mubr.f32.gmra.mxu0 %v390
        %v711 = vpop.f32.mrf.mxu0
        %v712 = vadd.f32 %v296, %v711
        %v713 = vpop.f32.mrf.mxu0
        %714 = vmatprep.mubr.f32.mxu0 0.0
        %715 = vmatmul.mubr.f32.gmra.mxu0 %v393
        %v716 = vpop.f32.mrf.mxu0
        %v717 = vadd.f32 %v296, %v716
        %v718 = vpop.f32.mrf.mxu0
        %719 = vmatprep.mubr.f32.mxu0 0.0
        %720 = vmatmul.mubr.f32.gmra.mxu0 %v396
        %v721 = vpop.f32.mrf.mxu0
        %v722 = vadd.f32 %v296, %v721
        %v723 = vpop.f32.mrf.mxu0
        %724 = vmatprep.mubr.f32.mxu0 0.0
        %725 = vmatmul.mubr.f32.gmra.mxu0 %v399
        %v726 = vpop.f32.mrf.mxu0
        %v727 = vadd.f32 %v296, %v726
        %v728 = vpop.f32.mrf.mxu0
        %729 = vmatprep.mubr.f32.mxu0 0.0
        %730 = vmatmul.mubr.f32.gmra.mxu0 %v402
        %v731 = vpop.f32.mrf.mxu0
        %v732 = vadd.f32 %v296, %v731
        %v733 = vpop.f32.mrf.mxu0
        %734 = vmatprep.mubr.f32.mxu0 0.0
        %735 = vmatmul.mubr.f32.gmra.mxu0 %v405
        %v736 = vpop.f32.mrf.mxu0
        %v737 = vadd.f32 %v296, %v736
        %v738 = vpop.f32.mrf.mxu0
        %739 = vmatprep.mubr.f32.mxu0 0.0
        %740 = vmatmul.mubr.f32.gmra.mxu0 %v408
        %v741 = vpop.f32.mrf.mxu0
        %v742 = vadd.f32 %v296, %v741
        %v743 = vpop.f32.mrf.mxu0
        %744 = vmatprep.mubr.f32.mxu0 0.0
        %745 = vmatmul.mubr.f32.gmra.mxu0 %v411
        %v746 = vpop.f32.mrf.mxu0
        %v747 = vadd.f32 %v296, %v746
        %v748 = vpop.f32.mrf.mxu0
        %749 = vmatprep.mubr.f32.mxu0 0.0
        %750 = vmatmul.mubr.f32.gmra.mxu0 %v414
        %v751 = vpop.f32.mrf.mxu0
        %v752 = vadd.f32 %v296, %v751
        %v753 = vpop.f32.mrf.mxu0
        %754 = vmatprep.mubr.f32.mxu0 0.0
        %755 = vmatmul.mubr.f32.gmra.mxu0 %v417
        %v756 = vpop.f32.mrf.mxu0
        %v757 = vadd.f32 %v296, %v756
        %v758 = vpop.f32.mrf.mxu0
        %759 = vmatprep.mubr.f32.mxu0 0.0
        %760 = vmatmul.mubr.f32.gmra.mxu0 %v420
        %v761 = vpop.f32.mrf.mxu0
        %v762 = vadd.f32 %v296, %v761
        %v763 = vpop.f32.mrf.mxu0
        %764 = vmatprep.mubr.f32.mxu0 0.0
        %765 = vmatmul.mubr.f32.gmra.mxu0 %v423
        %v766 = vpop.f32.mrf.mxu0
        %v767 = vadd.f32 %v296, %v766
        %v768 = vpop.f32.mrf.mxu0
        %769 = vmatprep.mubr.f32.mxu0 0.0
        %770 = vmatmul.mubr.f32.gmra.mxu0 %v426
        %v771 = vpop.f32.mrf.mxu0
        %v772 = vadd.f32 %v296, %v771
        %v773 = vpop.f32.mrf.mxu0
        %774 = vmatprep.mubr.f32.mxu0 0.0
        %775 = vmatmul.mubr.f32.gmra.mxu0 %v429
        %v776 = vpop.f32.mrf.mxu0
        %v777 = vadd.f32 %v296, %v776
        %v778 = vpop.f32.mrf.mxu0
        %779 = vmatprep.mubr.f32.mxu0 0.0
        %780 = vmatmul.mubr.f32.gmra.mxu0 %v432
        %v781 = vpop.f32.mrf.mxu0
        %v782 = vadd.f32 %v296, %v781
        %v783 = vpop.f32.mrf.mxu0
        %784 = vmatprep.mubr.f32.mxu0 0.0
        %785 = vmatmul.mubr.f32.gmra.mxu0 %v435
        %v786 = vpop.f32.mrf.mxu0
        %v787 = vadd.f32 %v296, %v786
        %v788 = vpop.f32.mrf.mxu0
        %789 = vmatprep.mubr.f32.mxu0 0.0
        %790 = vmatmul.mubr.f32.gmra.mxu0 %v438
        %v791 = vpop.f32.mrf.mxu0
        %v792 = vadd.f32 %v296, %v791
        %v793 = vpop.f32.mrf.mxu0
        %794 = vmatprep.mubr.f32.mxu0 0.0
        %795 = vmatmul.mubr.f32.gmra.mxu0 %v441
        %v796 = vpop.f32.mrf.mxu0
        %v797 = vadd.f32 %v296, %v796
        %v798 = vpop.f32.mrf.mxu0
        %799 = vmatprep.mubr.f32.mxu0 0.0
        %800 = vmatmul.mubr.f32.gmra.mxu0 %v444
        %v801 = vpop.f32.mrf.mxu0
        %v802 = vadd.f32 %v296, %v801
        %v803 = vpop.f32.mrf.mxu0
        %804 = vmatprep.mubr.f32.mxu0 0.0
        %805 = vmatmul.mubr.f32.gmra.mxu0 %v447
        %v806 = vpop.f32.mrf.mxu0
        %v807 = vadd.f32 %v296, %v806
        %v808 = vpop.f32.mrf.mxu0
        %809 = vmatprep.mubr.f32.mxu0 0.0
        %810 = vmatmul.mubr.f32.gmra.mxu0 %v450
        %v811 = vpop.f32.mrf.mxu0
        %v812 = vadd.f32 %v296, %v811
        %v813 = vpop.f32.mrf.mxu0
        %814 = vmatprep.mubr.f32.mxu0 0.0
        %815 = vmatmul.mubr.f32.gmra.mxu0 %v453
        %v816 = vpop.f32.mrf.mxu0
        %v817 = vadd.f32 %v296, %v816
        %v818 = vpop.f32.mrf.mxu0
        %819 = vmatprep.mubr.f32.mxu0 0.0
        %820 = vmatmul.mubr.f32.gmra.mxu0 %v456
        %v821 = vpop.f32.mrf.mxu0
        %v822 = vadd.f32 %v296, %v821
        %v823 = vpop.f32.mrf.mxu0
        %824 = vmatprep.mubr.f32.mxu0 0.0
        %825 = vmatmul.mubr.f32.gmra.mxu0 %v459
        %v826 = vpop.f32.mrf.mxu0
        %v827 = vadd.f32 %v296, %v826
        %v828 = vpop.f32.mrf.mxu0
        %829 = vmatprep.mubr.f32.mxu0 0.0
        %830 = vmatmul.mubr.f32.gmra.mxu0 %v462
        %v831 = vpop.f32.mrf.mxu0
        %v832 = vadd.f32 %v296, %v831
        %v833 = vpop.f32.mrf.mxu0
        %834 = vmatprep.mubr.f32.mxu0 0.0
        %835 = vmatmul.mubr.f32.gmra.mxu0 %v465
        %v836 = vpop.f32.mrf.mxu0
        %v837 = vadd.f32 %v296, %v836
        %v838 = vpop.f32.mrf.mxu0
        %839 = vmatprep.mubr.f32.mxu0 0.0
        %840 = vmatmul.mubr.f32.gmra.mxu0 %v468
        %v841 = vpop.f32.mrf.mxu0
        %v842 = vadd.f32 %v296, %v841
        %v843 = vpop.f32.mrf.mxu0
        %844 = vmatprep.mubr.f32.mxu0 0.0
        %845 = vmatmul.mubr.f32.gmra.mxu0 %v471
        %v846 = vpop.f32.mrf.mxu0
        %v847 = vadd.f32 %v296, %v846
        %v848 = vpop.f32.mrf.mxu0
        %849 = vmatprep.mubr.f32.mxu0 0.0
        %850 = vmatmul.mubr.f32.gmra.mxu0 %v474
        %v851 = vpop.f32.mrf.mxu0
        %v852 = vadd.f32 %v296, %v851
        %v853 = vpop.f32.mrf.mxu0
        %854 = vmatprep.mubr.f32.mxu0 0.0
        %855 = vmatmul.mubr.f32.gmra.mxu0 %v477
        %v856 = vpop.f32.mrf.mxu0
        %v857 = vadd.f32 %v296, %v856
        %v858 = vpop.f32.mrf.mxu0
        %859 = vmatprep.mubr.f32.mxu0 0.0
        %860 = vmatmul.mubr.f32.gmra.mxu0 %v480
        %v861 = vpop.f32.mrf.mxu0
        %v862 = vadd.f32 %v296, %v861
        %v863 = vpop.f32.mrf.mxu0
        %864 = vmatprep.mubr.f32.mxu0 0.0
        %865 = vmatmul.mubr.f32.gmra.mxu0 %v483
        %v866 = vpop.f32.mrf.mxu0
        %v867 = vadd.f32 %v296, %v866
        %v868 = vpop.f32.mrf.mxu0
        %869 = vmatprep.mubr.f32.mxu0 0.0
        %870 = vmatmul.mubr.f32.gmra.mxu0 %v486
        %v871 = vpop.f32.mrf.mxu0
        %v872 = vadd.f32 %v296, %v871
        %v873 = vpop.f32.mrf.mxu0
        %874 = vmatprep.mubr.f32.mxu0 0.0
        %875 = vmatmul.mubr.f32.gmra.mxu0 %v489
        %v876 = vpop.f32.mrf.mxu0
        %v877 = vadd.f32 %v296, %v876
        %v878 = vpop.f32.mrf.mxu0
        %879 = vdwg.mxu0
        %v880 = vmax.f32 %v562, 0.0
        %v881 = vmax.f32 %v567, 0.0
        %v882 = vmax.f32 %v572, 0.0
        %v883 = vmax.f32 %v577, 0.0
        %v884 = vmax.f32 %v582, 0.0
        %v885 = vmax.f32 %v587, 0.0
        %v886 = vmax.f32 %v592, 0.0
        %v887 = vmax.f32 %v597, 0.0
        %v888 = vmax.f32 %v602, 0.0
        %v889 = vmax.f32 %v607, 0.0
        %v890 = vmax.f32 %v612, 0.0
        %v891 = vmax.f32 %v617, 0.0
        %v892 = vmax.f32 %v622, 0.0
        %v893 = vmax.f32 %v627, 0.0
        %v894 = vmax.f32 %v632, 0.0
        %v895 = vmax.f32 %v637, 0.0
        %v896 = vmax.f32 %v642, 0.0
        %v897 = vmax.f32 %v647, 0.0
        %v898 = vmax.f32 %v652, 0.0
        %v899 = vmax.f32 %v657, 0.0
        %v900 = vmax.f32 %v662, 0.0
        %v901 = vmax.f32 %v667, 0.0
        %v902 = vmax.f32 %v672, 0.0
        %v903 = vmax.f32 %v677, 0.0
        %v904 = vmax.f32 %v682, 0.0
        %v905 = vmax.f32 %v687, 0.0
        %v906 = vmax.f32 %v692, 0.0
        %v907 = vmax.f32 %v697, 0.0
        %v908 = vmax.f32 %v702, 0.0
        %v909 = vmax.f32 %v707, 0.0
        %v910 = vmax.f32 %v712, 0.0
        %v911 = vmax.f32 %v717, 0.0
        %v912 = vmax.f32 %v722, 0.0
        %v913 = vmax.f32 %v727, 0.0
        %v914 = vmax.f32 %v732, 0.0
        %v915 = vmax.f32 %v737, 0.0
        %v916 = vmax.f32 %v742, 0.0
        %v917 = vmax.f32 %v747, 0.0
        %v918 = vmax.f32 %v752, 0.0
        %v919 = vmax.f32 %v757, 0.0
        %v920 = vmax.f32 %v762, 0.0
        %v921 = vmax.f32 %v767, 0.0
        %v922 = vmax.f32 %v772, 0.0
        %v923 = vmax.f32 %v777, 0.0
        %v924 = vmax.f32 %v782, 0.0
        %v925 = vmax.f32 %v787, 0.0
        %v926 = vmax.f32 %v792, 0.0
        %v927 = vmax.f32 %v797, 0.0
        %v928 = vmax.f32 %v802, 0.0
        %v929 = vmax.f32 %v807, 0.0
        %v930 = vmax.f32 %v812, 0.0
        %v931 = vmax.f32 %v817, 0.0
        %v932 = vmax.f32 %v822, 0.0
        %v933 = vmax.f32 %v827, 0.0
        %v934 = vmax.f32 %v832, 0.0
        %v935 = vmax.f32 %v837, 0.0
        %v936 = vmax.f32 %v842, 0.0
        %v937 = vmax.f32 %v847, 0.0
        %v938 = vmax.f32 %v852, 0.0
        %v939 = vmax.f32 %v857, 0.0
        %v940 = vmax.f32 %v862, 0.0
        %v941 = vmax.f32 %v867, 0.0
        %v942 = vmax.f32 %v872, 0.0
        %v943 = vmax.f32 %v877, 0.0
        %v944 = vld [vmem:[%s3] sm:$0xff]
        %v945 = vld [vmem:[%s3 + $0x8] sm:$0xff]
        %v946 = vld [vmem:[%s3 + $0x10] sm:$0xff]
        %v947 = vld [vmem:[%s3 + $0x18] sm:$0xff]
        %v948 = vld [vmem:[%s3 + $0x20] sm:$0xff]
        %v949 = vld [vmem:[%s3 + $0x28] sm:$0xff]
        %v950 = vld [vmem:[%s3 + $0x30] sm:$0xff]
        %v951 = vld [vmem:[%s3 + $0x38] sm:$0xff]
        %v952 = vld [vmem:[%s3 + $0x40] sm:$0xff]
        %v953 = vld [vmem:[%s3 + $0x48] sm:$0xff]
        %v954 = vld [vmem:[%s3 + $0x50] sm:$0xff]
        %v955 = vld [vmem:[%s3 + $0x58] sm:$0xff]
        %v956 = vld [vmem:[%s3 + $0x60] sm:$0xff]
        %v957 = vld [vmem:[%s3 + $0x68] sm:$0xff]
        %v958 = vld [vmem:[%s3 + $0x70] sm:$0xff]
        %v959 = vld [vmem:[%s3 + $0x78] sm:$0xff]
        %v960 = vld [vmem:[%s4] sm:$0x1]
        %v962 = vlaneseq
        %v963 = vshrl.u32 %v962, 7
        %v964 = vsub.s32 0, %v963
        %v965 = vrot.slane %v960, %v964
        %967 = vmatprep.subr.mxu0 0.0
        %968 = vmatpush1.msra.mxu0 %v959
        %969 = vmatprep.subr.mxu0 0.0
        %970 = vmatpush1.msra.mxu0 %v958
        %971 = vmatprep.subr.mxu0 0.0
        %972 = vmatpush1.msra.mxu0 %v957
        %973 = vmatprep.subr.mxu0 0.0
        %974 = vmatpush1.msra.mxu0 %v956
        %975 = vmatprep.subr.mxu0 0.0
        %976 = vmatpush1.msra.mxu0 %v955
        %977 = vmatprep.subr.mxu0 0.0
        %978 = vmatpush1.msra.mxu0 %v954
        %979 = vmatprep.subr.mxu0 0.0
        %980 = vmatpush1.msra.mxu0 %v953
        %981 = vmatprep.subr.mxu0 0.0
        %982 = vmatpush1.msra.mxu0 %v952
        %983 = vmatprep.subr.mxu0 0.0
        %984 = vmatpush1.msra.mxu0 %v951
        %985 = vmatprep.subr.mxu0 0.0
        %986 = vmatpush1.msra.mxu0 %v950
        %987 = vmatprep.subr.mxu0 0.0
        %988 = vmatpush1.msra.mxu0 %v949
        %989 = vmatprep.subr.mxu0 0.0
        %990 = vmatpush1.msra.mxu0 %v948
        %991 = vmatprep.subr.mxu0 0.0
        %992 = vmatpush1.msra.mxu0 %v947
        %993 = vmatprep.subr.mxu0 0.0
        %994 = vmatpush1.msra.mxu0 %v946
        %995 = vmatprep.subr.mxu0 0.0
        %996 = vmatpush1.msra.mxu0 %v945
        %997 = vmatprep.subr.mxu0 0.0
        %998 = vmatpush1.msra.mxu0 %v944
        %999 = vmatprep.subr.mxu0 0.0
        %1000 = vmatpush2.msra.mxu0 0.0
        %1001 = vmatprep.subr.mxu0 0.0
        %1002 = vmatpush2.msra.mxu0 0.0
        %1003 = vmatprep.subr.mxu0 0.0
        %1004 = vmatpush2.msra.mxu0 0.0
        %1005 = vmatprep.subr.mxu0 0.0
        %1006 = vmatpush2.msra.mxu0 0.0
        %1007 = vmatprep.subr.mxu0 0.0
        %1008 = vmatpush2.msra.mxu0 0.0
        %1009 = vmatprep.subr.mxu0 0.0
        %1010 = vmatpush2.msra.mxu0 0.0
        %1011 = vmatprep.subr.mxu0 0.0
        %1012 = vmatpush2.msra.mxu0 0.0
        %1013 = vmatprep.subr.mxu0 0.0
        %1014 = vmatpush2.msra.mxu0 0.0
        %1015 = vmatprep.subr.mxu0 0.0
        %1016 = vmatpush2.msra.mxu0 0.0
        %1017 = vmatprep.subr.mxu0 0.0
        %1018 = vmatpush2.msra.mxu0 0.0
        %1019 = vmatprep.subr.mxu0 0.0
        %1020 = vmatpush2.msra.mxu0 0.0
        %1021 = vmatprep.subr.mxu0 0.0
        %1022 = vmatpush2.msra.mxu0 0.0
        %1023 = vmatprep.subr.mxu0 0.0
        %1024 = vmatpush2.msra.mxu0 0.0
        %1025 = vmatprep.subr.mxu0 0.0
        %1026 = vmatpush2.msra.mxu0 0.0
        %1027 = vmatprep.subr.mxu0 0.0
        %1028 = vmatpush2.msra.mxu0 0.0
        %1029 = vmatprep.subr.mxu0 0.0
        %1030 = vmatpush2.msra.mxu0 0.0
        %1031 = vmatprep.mubr.f32.mxu0 0.0
        %1032 = vmatmul.mubr.f32.gmra.mxu0 %v880
        %v1033 = vpop.f32.mrf.mxu0
        %v1034 = vadd.f32 %v965, %v1033
        %v1035 = vpop.f32.mrf.mxu0
        %1036 = vmatprep.mubr.f32.mxu0 0.0
        %1037 = vmatmul.mubr.f32.gmra.mxu0 %v881
        %v1038 = vpop.f32.mrf.mxu0
        %v1039 = vadd.f32 %v965, %v1038
        %v1040 = vpop.f32.mrf.mxu0
        %1041 = vmatprep.mubr.f32.mxu0 0.0
        %1042 = vmatmul.mubr.f32.gmra.mxu0 %v882
        %v1043 = vpop.f32.mrf.mxu0
        %v1044 = vadd.f32 %v965, %v1043
        %v1045 = vpop.f32.mrf.mxu0
        %1046 = vmatprep.mubr.f32.mxu0 0.0
        %1047 = vmatmul.mubr.f32.gmra.mxu0 %v883
        %v1048 = vpop.f32.mrf.mxu0
        %v1049 = vadd.f32 %v965, %v1048
        %v1050 = vpop.f32.mrf.mxu0
        %1051 = vmatprep.mubr.f32.mxu0 0.0
        %1052 = vmatmul.mubr.f32.gmra.mxu0 %v884
        %v1053 = vpop.f32.mrf.mxu0
        %v1054 = vadd.f32 %v965, %v1053
        %v1055 = vpop.f32.mrf.mxu0
        %1056 = vmatprep.mubr.f32.mxu0 0.0
        %1057 = vmatmul.mubr.f32.gmra.mxu0 %v885
        %v1058 = vpop.f32.mrf.mxu0
        %v1059 = vadd.f32 %v965, %v1058
        %v1060 = vpop.f32.mrf.mxu0
        %1061 = vmatprep.mubr.f32.mxu0 0.0
        %1062 = vmatmul.mubr.f32.gmra.mxu0 %v886
        %v1063 = vpop.f32.mrf.mxu0
        %v1064 = vadd.f32 %v965, %v1063
        %v1065 = vpop.f32.mrf.mxu0
        %1066 = vmatprep.mubr.f32.mxu0 0.0
        %1067 = vmatmul.mubr.f32.gmra.mxu0 %v887
        %v1068 = vpop.f32.mrf.mxu0
        %v1069 = vadd.f32 %v965, %v1068
        %v1070 = vpop.f32.mrf.mxu0
        %1071 = vmatprep.mubr.f32.mxu0 0.0
        %1072 = vmatmul.mubr.f32.gmra.mxu0 %v888
        %v1073 = vpop.f32.mrf.mxu0
        %v1074 = vadd.f32 %v965, %v1073
        %v1075 = vpop.f32.mrf.mxu0
        %1076 = vmatprep.mubr.f32.mxu0 0.0
        %1077 = vmatmul.mubr.f32.gmra.mxu0 %v889
        %v1078 = vpop.f32.mrf.mxu0
        %v1079 = vadd.f32 %v965, %v1078
        %v1080 = vpop.f32.mrf.mxu0
        %1081 = vmatprep.mubr.f32.mxu0 0.0
        %1082 = vmatmul.mubr.f32.gmra.mxu0 %v890
        %v1083 = vpop.f32.mrf.mxu0
        %v1084 = vadd.f32 %v965, %v1083
        %v1085 = vpop.f32.mrf.mxu0
        %1086 = vmatprep.mubr.f32.mxu0 0.0
        %1087 = vmatmul.mubr.f32.gmra.mxu0 %v891
        %v1088 = vpop.f32.mrf.mxu0
        %v1089 = vadd.f32 %v965, %v1088
        %v1090 = vpop.f32.mrf.mxu0
        %1091 = vmatprep.mubr.f32.mxu0 0.0
        %1092 = vmatmul.mubr.f32.gmra.mxu0 %v892
        %v1093 = vpop.f32.mrf.mxu0
        %v1094 = vadd.f32 %v965, %v1093
        %v1095 = vpop.f32.mrf.mxu0
        %1096 = vmatprep.mubr.f32.mxu0 0.0
        %1097 = vmatmul.mubr.f32.gmra.mxu0 %v893
        %v1098 = vpop.f32.mrf.mxu0
        %v1099 = vadd.f32 %v965, %v1098
        %v1100 = vpop.f32.mrf.mxu0
        %1101 = vmatprep.mubr.f32.mxu0 0.0
        %1102 = vmatmul.mubr.f32.gmra.mxu0 %v894
        %v1103 = vpop.f32.mrf.mxu0
        %v1104 = vadd.f32 %v965, %v1103
        %v1105 = vpop.f32.mrf.mxu0
        %1106 = vmatprep.mubr.f32.mxu0 0.0
        %1107 = vmatmul.mubr.f32.gmra.mxu0 %v895
        %v1108 = vpop.f32.mrf.mxu0
        %v1109 = vadd.f32 %v965, %v1108
        %v1110 = vpop.f32.mrf.mxu0
        %1111 = vmatprep.mubr.f32.mxu0 0.0
        %1112 = vmatmul.mubr.f32.gmra.mxu0 %v896
        %v1113 = vpop.f32.mrf.mxu0
        %v1114 = vadd.f32 %v965, %v1113
        %v1115 = vpop.f32.mrf.mxu0
        %1116 = vmatprep.mubr.f32.mxu0 0.0
        %1117 = vmatmul.mubr.f32.gmra.mxu0 %v897
        %v1118 = vpop.f32.mrf.mxu0
        %v1119 = vadd.f32 %v965, %v1118
        %v1120 = vpop.f32.mrf.mxu0
        %1121 = vmatprep.mubr.f32.mxu0 0.0
        %1122 = vmatmul.mubr.f32.gmra.mxu0 %v898
        %v1123 = vpop.f32.mrf.mxu0
        %v1124 = vadd.f32 %v965, %v1123
        %v1125 = vpop.f32.mrf.mxu0
        %1126 = vmatprep.mubr.f32.mxu0 0.0
        %1127 = vmatmul.mubr.f32.gmra.mxu0 %v899
        %v1128 = vpop.f32.mrf.mxu0
        %v1129 = vadd.f32 %v965, %v1128
        %v1130 = vpop.f32.mrf.mxu0
        %1131 = vmatprep.mubr.f32.mxu0 0.0
        %1132 = vmatmul.mubr.f32.gmra.mxu0 %v900
        %v1133 = vpop.f32.mrf.mxu0
        %v1134 = vadd.f32 %v965, %v1133
        %v1135 = vpop.f32.mrf.mxu0
        %1136 = vmatprep.mubr.f32.mxu0 0.0
        %1137 = vmatmul.mubr.f32.gmra.mxu0 %v901
        %v1138 = vpop.f32.mrf.mxu0
        %v1139 = vadd.f32 %v965, %v1138
        %v1140 = vpop.f32.mrf.mxu0
        %1141 = vmatprep.mubr.f32.mxu0 0.0
        %1142 = vmatmul.mubr.f32.gmra.mxu0 %v902
        %v1143 = vpop.f32.mrf.mxu0
        %v1144 = vadd.f32 %v965, %v1143
        %v1145 = vpop.f32.mrf.mxu0
        %1146 = vmatprep.mubr.f32.mxu0 0.0
        %1147 = vmatmul.mubr.f32.gmra.mxu0 %v903
        %v1148 = vpop.f32.mrf.mxu0
        %v1149 = vadd.f32 %v965, %v1148
        %v1150 = vpop.f32.mrf.mxu0
        %1151 = vmatprep.mubr.f32.mxu0 0.0
        %1152 = vmatmul.mubr.f32.gmra.mxu0 %v904
        %v1153 = vpop.f32.mrf.mxu0
        %v1154 = vadd.f32 %v965, %v1153
        %v1155 = vpop.f32.mrf.mxu0
        %1156 = vmatprep.mubr.f32.mxu0 0.0
        %1157 = vmatmul.mubr.f32.gmra.mxu0 %v905
        %v1158 = vpop.f32.mrf.mxu0
        %v1159 = vadd.f32 %v965, %v1158
        %v1160 = vpop.f32.mrf.mxu0
        %1161 = vmatprep.mubr.f32.mxu0 0.0
        %1162 = vmatmul.mubr.f32.gmra.mxu0 %v906
        %v1163 = vpop.f32.mrf.mxu0
        %v1164 = vadd.f32 %v965, %v1163
        %v1165 = vpop.f32.mrf.mxu0
        %1166 = vmatprep.mubr.f32.mxu0 0.0
        %1167 = vmatmul.mubr.f32.gmra.mxu0 %v907
        %v1168 = vpop.f32.mrf.mxu0
        %v1169 = vadd.f32 %v965, %v1168
        %v1170 = vpop.f32.mrf.mxu0
        %1171 = vmatprep.mubr.f32.mxu0 0.0
        %1172 = vmatmul.mubr.f32.gmra.mxu0 %v908
        %v1173 = vpop.f32.mrf.mxu0
        %v1174 = vadd.f32 %v965, %v1173
        %v1175 = vpop.f32.mrf.mxu0
        %1176 = vmatprep.mubr.f32.mxu0 0.0
        %1177 = vmatmul.mubr.f32.gmra.mxu0 %v909
        %v1178 = vpop.f32.mrf.mxu0
        %v1179 = vadd.f32 %v965, %v1178
        %v1180 = vpop.f32.mrf.mxu0
        %1181 = vmatprep.mubr.f32.mxu0 0.0
        %1182 = vmatmul.mubr.f32.gmra.mxu0 %v910
        %v1183 = vpop.f32.mrf.mxu0
        %v1184 = vadd.f32 %v965, %v1183
        %v1185 = vpop.f32.mrf.mxu0
        %1186 = vmatprep.mubr.f32.mxu0 0.0
        %1187 = vmatmul.mubr.f32.gmra.mxu0 %v911
        %v1188 = vpop.f32.mrf.mxu0
        %v1189 = vadd.f32 %v965, %v1188
        %v1190 = vpop.f32.mrf.mxu0
        %1191 = vmatprep.mubr.f32.mxu0 0.0
        %1192 = vmatmul.mubr.f32.gmra.mxu0 %v912
        %v1193 = vpop.f32.mrf.mxu0
        %v1194 = vadd.f32 %v965, %v1193
        %v1195 = vpop.f32.mrf.mxu0
        %1196 = vmatprep.mubr.f32.mxu0 0.0
        %1197 = vmatmul.mubr.f32.gmra.mxu0 %v913
        %v1198 = vpop.f32.mrf.mxu0
        %v1199 = vadd.f32 %v965, %v1198
        %v1200 = vpop.f32.mrf.mxu0
        %1201 = vmatprep.mubr.f32.mxu0 0.0
        %1202 = vmatmul.mubr.f32.gmra.mxu0 %v914
        %v1203 = vpop.f32.mrf.mxu0
        %v1204 = vadd.f32 %v965, %v1203
        %v1205 = vpop.f32.mrf.mxu0
        %1206 = vmatprep.mubr.f32.mxu0 0.0
        %1207 = vmatmul.mubr.f32.gmra.mxu0 %v915
        %v1208 = vpop.f32.mrf.mxu0
        %v1209 = vadd.f32 %v965, %v1208
        %v1210 = vpop.f32.mrf.mxu0
        %1211 = vmatprep.mubr.f32.mxu0 0.0
        %1212 = vmatmul.mubr.f32.gmra.mxu0 %v916
        %v1213 = vpop.f32.mrf.mxu0
        %v1214 = vadd.f32 %v965, %v1213
        %v1215 = vpop.f32.mrf.mxu0
        %1216 = vmatprep.mubr.f32.mxu0 0.0
        %1217 = vmatmul.mubr.f32.gmra.mxu0 %v917
        %v1218 = vpop.f32.mrf.mxu0
        %v1219 = vadd.f32 %v965, %v1218
        %v1220 = vpop.f32.mrf.mxu0
        %1221 = vmatprep.mubr.f32.mxu0 0.0
        %1222 = vmatmul.mubr.f32.gmra.mxu0 %v918
        %v1223 = vpop.f32.mrf.mxu0
        %v1224 = vadd.f32 %v965, %v1223
        %v1225 = vpop.f32.mrf.mxu0
        %1226 = vmatprep.mubr.f32.mxu0 0.0
        %1227 = vmatmul.mubr.f32.gmra.mxu0 %v919
        %v1228 = vpop.f32.mrf.mxu0
        %v1229 = vadd.f32 %v965, %v1228
        %v1230 = vpop.f32.mrf.mxu0
        %1231 = vmatprep.mubr.f32.mxu0 0.0
        %1232 = vmatmul.mubr.f32.gmra.mxu0 %v920
        %v1233 = vpop.f32.mrf.mxu0
        %v1234 = vadd.f32 %v965, %v1233
        %v1235 = vpop.f32.mrf.mxu0
        %1236 = vmatprep.mubr.f32.mxu0 0.0
        %1237 = vmatmul.mubr.f32.gmra.mxu0 %v921
        %v1238 = vpop.f32.mrf.mxu0
        %v1239 = vadd.f32 %v965, %v1238
        %v1240 = vpop.f32.mrf.mxu0
        %1241 = vmatprep.mubr.f32.mxu0 0.0
        %1242 = vmatmul.mubr.f32.gmra.mxu0 %v922
        %v1243 = vpop.f32.mrf.mxu0
        %v1244 = vadd.f32 %v965, %v1243
        %v1245 = vpop.f32.mrf.mxu0
        %1246 = vmatprep.mubr.f32.mxu0 0.0
        %1247 = vmatmul.mubr.f32.gmra.mxu0 %v923
        %v1248 = vpop.f32.mrf.mxu0
        %v1249 = vadd.f32 %v965, %v1248
        %v1250 = vpop.f32.mrf.mxu0
        %1251 = vmatprep.mubr.f32.mxu0 0.0
        %1252 = vmatmul.mubr.f32.gmra.mxu0 %v924
        %v1253 = vpop.f32.mrf.mxu0
        %v1254 = vadd.f32 %v965, %v1253
        %v1255 = vpop.f32.mrf.mxu0
        %1256 = vmatprep.mubr.f32.mxu0 0.0
        %1257 = vmatmul.mubr.f32.gmra.mxu0 %v925
        %v1258 = vpop.f32.mrf.mxu0
        %v1259 = vadd.f32 %v965, %v1258
        %v1260 = vpop.f32.mrf.mxu0
        %1261 = vmatprep.mubr.f32.mxu0 0.0
        %1262 = vmatmul.mubr.f32.gmra.mxu0 %v926
        %v1263 = vpop.f32.mrf.mxu0
        %v1264 = vadd.f32 %v965, %v1263
        %v1265 = vpop.f32.mrf.mxu0
        %1266 = vmatprep.mubr.f32.mxu0 0.0
        %1267 = vmatmul.mubr.f32.gmra.mxu0 %v927
        %v1268 = vpop.f32.mrf.mxu0
        %v1269 = vadd.f32 %v965, %v1268
        %v1270 = vpop.f32.mrf.mxu0
        %1271 = vmatprep.mubr.f32.mxu0 0.0
        %1272 = vmatmul.mubr.f32.gmra.mxu0 %v928
        %v1273 = vpop.f32.mrf.mxu0
        %v1274 = vadd.f32 %v965, %v1273
        %v1275 = vpop.f32.mrf.mxu0
        %1276 = vmatprep.mubr.f32.mxu0 0.0
        %1277 = vmatmul.mubr.f32.gmra.mxu0 %v929
        %v1278 = vpop.f32.mrf.mxu0
        %v1279 = vadd.f32 %v965, %v1278
        %v1280 = vpop.f32.mrf.mxu0
        %1281 = vmatprep.mubr.f32.mxu0 0.0
        %1282 = vmatmul.mubr.f32.gmra.mxu0 %v930
        %v1283 = vpop.f32.mrf.mxu0
        %v1284 = vadd.f32 %v965, %v1283
        %v1285 = vpop.f32.mrf.mxu0
        %1286 = vmatprep.mubr.f32.mxu0 0.0
        %1287 = vmatmul.mubr.f32.gmra.mxu0 %v931
        %v1288 = vpop.f32.mrf.mxu0
        %v1289 = vadd.f32 %v965, %v1288
        %v1290 = vpop.f32.mrf.mxu0
        %1291 = vmatprep.mubr.f32.mxu0 0.0
        %1292 = vmatmul.mubr.f32.gmra.mxu0 %v932
        %v1293 = vpop.f32.mrf.mxu0
        %v1294 = vadd.f32 %v965, %v1293
        %v1295 = vpop.f32.mrf.mxu0
        %1296 = vmatprep.mubr.f32.mxu0 0.0
        %1297 = vmatmul.mubr.f32.gmra.mxu0 %v933
        %v1298 = vpop.f32.mrf.mxu0
        %v1299 = vadd.f32 %v965, %v1298
        %v1300 = vpop.f32.mrf.mxu0
        %1301 = vmatprep.mubr.f32.mxu0 0.0
        %1302 = vmatmul.mubr.f32.gmra.mxu0 %v934
        %v1303 = vpop.f32.mrf.mxu0
        %v1304 = vadd.f32 %v965, %v1303
        %v1305 = vpop.f32.mrf.mxu0
        %1306 = vmatprep.mubr.f32.mxu0 0.0
        %1307 = vmatmul.mubr.f32.gmra.mxu0 %v935
        %v1308 = vpop.f32.mrf.mxu0
        %v1309 = vadd.f32 %v965, %v1308
        %v1310 = vpop.f32.mrf.mxu0
        %1311 = vmatprep.mubr.f32.mxu0 0.0
        %1312 = vmatmul.mubr.f32.gmra.mxu0 %v936
        %v1313 = vpop.f32.mrf.mxu0
        %v1314 = vadd.f32 %v965, %v1313
        %v1315 = vpop.f32.mrf.mxu0
        %1316 = vmatprep.mubr.f32.mxu0 0.0
        %1317 = vmatmul.mubr.f32.gmra.mxu0 %v937
        %v1318 = vpop.f32.mrf.mxu0
        %v1319 = vadd.f32 %v965, %v1318
        %v1320 = vpop.f32.mrf.mxu0
        %1321 = vmatprep.mubr.f32.mxu0 0.0
        %1322 = vmatmul.mubr.f32.gmra.mxu0 %v938
        %v1323 = vpop.f32.mrf.mxu0
        %v1324 = vadd.f32 %v965, %v1323
        %v1325 = vpop.f32.mrf.mxu0
        %1326 = vmatprep.mubr.f32.mxu0 0.0
        %1327 = vmatmul.mubr.f32.gmra.mxu0 %v939
        %v1328 = vpop.f32.mrf.mxu0
        %v1329 = vadd.f32 %v965, %v1328
        %v1330 = vpop.f32.mrf.mxu0
        %1331 = vmatprep.mubr.f32.mxu0 0.0
        %1332 = vmatmul.mubr.f32.gmra.mxu0 %v940
        %v1333 = vpop.f32.mrf.mxu0
        %v1334 = vadd.f32 %v965, %v1333
        %v1335 = vpop.f32.mrf.mxu0
        %1336 = vmatprep.mubr.f32.mxu0 0.0
        %1337 = vmatmul.mubr.f32.gmra.mxu0 %v941
        %v1338 = vpop.f32.mrf.mxu0
        %v1339 = vadd.f32 %v965, %v1338
        %v1340 = vpop.f32.mrf.mxu0
        %1341 = vmatprep.mubr.f32.mxu0 0.0
        %1342 = vmatmul.mubr.f32.gmra.mxu0 %v942
        %v1343 = vpop.f32.mrf.mxu0
        %v1344 = vadd.f32 %v965, %v1343
        %v1345 = vpop.f32.mrf.mxu0
        %1346 = vmatprep.mubr.f32.mxu0 0.0
        %1347 = vmatmul.mubr.f32.gmra.mxu0 %v943
        %v1348 = vpop.f32.mrf.mxu0
        %v1349 = vadd.f32 %v965, %v1348
        %v1350 = vpop.f32.mrf.mxu0
        %1351 = vdwg.mxu0
        %1352 = vst [vmem:[%s218] sm:$0xff] %v1034
        %1353 = vst [vmem:[%s218 + $0x8] sm:$0xff] %v1039
        %1354 = vst [vmem:[%s218 + $0x10] sm:$0xff] %v1044
        %1355 = vst [vmem:[%s218 + $0x18] sm:$0xff] %v1049
        %1356 = vst [vmem:[%s218 + $0x20] sm:$0xff] %v1054
        %1357 = vst [vmem:[%s218 + $0x28] sm:$0xff] %v1059
        %1358 = vst [vmem:[%s218 + $0x30] sm:$0xff] %v1064
        %1359 = vst [vmem:[%s218 + $0x38] sm:$0xff] %v1069
        %1360 = vst [vmem:[%s218 + $0x40] sm:$0xff] %v1074
        %1361 = vst [vmem:[%s218 + $0x48] sm:$0xff] %v1079
        %1362 = vst [vmem:[%s218 + $0x50] sm:$0xff] %v1084
        %1363 = vst [vmem:[%s218 + $0x58] sm:$0xff] %v1089
        %1364 = vst [vmem:[%s218 + $0x60] sm:$0xff] %v1094
        %1365 = vst [vmem:[%s218 + $0x68] sm:$0xff] %v1099
        %1366 = vst [vmem:[%s218 + $0x70] sm:$0xff] %v1104
        %1367 = vst [vmem:[%s218 + $0x78] sm:$0xff] %v1109
        %1368 = vst [vmem:[%s218 + $0x80] sm:$0xff] %v1114
        %1369 = vst [vmem:[%s218 + $0x88] sm:$0xff] %v1119
        %1370 = vst [vmem:[%s218 + $0x90] sm:$0xff] %v1124
        %1371 = vst [vmem:[%s218 + $0x98] sm:$0xff] %v1129
        %1372 = vst [vmem:[%s218 + $0xa0] sm:$0xff] %v1134
        %1373 = vst [vmem:[%s218 + $0xa8] sm:$0xff] %v1139
        %1374 = vst [vmem:[%s218 + $0xb0] sm:$0xff] %v1144
        %1375 = vst [vmem:[%s218 + $0xb8] sm:$0xff] %v1149
        %1376 = vst [vmem:[%s218 + $0xc0] sm:$0xff] %v1154
        %1377 = vst [vmem:[%s218 + $0xc8] sm:$0xff] %v1159
        %1378 = vst [vmem:[%s218 + $0xd0] sm:$0xff] %v1164
        %1379 = vst [vmem:[%s218 + $0xd8] sm:$0xff] %v1169
        %1380 = vst [vmem:[%s218 + $0xe0] sm:$0xff] %v1174
        %1381 = vst [vmem:[%s218 + $0xe8] sm:$0xff] %v1179
        %1382 = vst [vmem:[%s218 + $0xf0] sm:$0xff] %v1184
        %1383 = vst [vmem:[%s218 + $0xf8] sm:$0xff] %v1189
        %1384 = vst [vmem:[%s218 + $0x100] sm:$0xff] %v1194
        %1385 = vst [vmem:[%s218 + $0x108] sm:$0xff] %v1199
        %1386 = vst [vmem:[%s218 + $0x110] sm:$0xff] %v1204
        %1387 = vst [vmem:[%s218 + $0x118] sm:$0xff] %v1209
        %1388 = vst [vmem:[%s218 + $0x120] sm:$0xff] %v1214
        %1389 = vst [vmem:[%s218 + $0x128] sm:$0xff] %v1219
        %1390 = vst [vmem:[%s218 + $0x130] sm:$0xff] %v1224
        %1391 = vst [vmem:[%s218 + $0x138] sm:$0xff] %v1229
        %1392 = vst [vmem:[%s218 + $0x140] sm:$0xff] %v1234
        %1393 = vst [vmem:[%s218 + $0x148] sm:$0xff] %v1239
        %1394 = vst [vmem:[%s218 + $0x150] sm:$0xff] %v1244
        %1395 = vst [vmem:[%s218 + $0x158] sm:$0xff] %v1249
        %1396 = vst [vmem:[%s218 + $0x160] sm:$0xff] %v1254
        %1397 = vst [vmem:[%s218 + $0x168] sm:$0xff] %v1259
        %1398 = vst [vmem:[%s218 + $0x170] sm:$0xff] %v1264
        %1399 = vst [vmem:[%s218 + $0x178] sm:$0xff] %v1269
        %1400 = vst [vmem:[%s218 + $0x180] sm:$0xff] %v1274
        %1401 = vst [vmem:[%s218 + $0x188] sm:$0xff] %v1279
        %1402 = vst [vmem:[%s218 + $0x190] sm:$0xff] %v1284
        %1403 = vst [vmem:[%s218 + $0x198] sm:$0xff] %v1289
        %1404 = vst [vmem:[%s218 + $0x1a0] sm:$0xff] %v1294
        %1405 = vst [vmem:[%s218 + $0x1a8] sm:$0xff] %v1299
        %1406 = vst [vmem:[%s218 + $0x1b0] sm:$0xff] %v1304
        %1407 = vst [vmem:[%s218 + $0x1b8] sm:$0xff] %v1309
        %1408 = vst [vmem:[%s218 + $0x1c0] sm:$0xff] %v1314
        %1409 = vst [vmem:[%s218 + $0x1c8] sm:$0xff] %v1319
        %1410 = vst [vmem:[%s218 + $0x1d0] sm:$0xff] %v1324
        %1411 = vst [vmem:[%s218 + $0x1d8] sm:$0xff] %v1329
        %1412 = vst [vmem:[%s218 + $0x1e0] sm:$0xff] %v1334
        %1413 = vst [vmem:[%s218 + $0x1e8] sm:$0xff] %v1339
        %1414 = vst [vmem:[%s218 + $0x1f0] sm:$0xff] %v1344
        %1415 = vst [vmem:[%s218 + $0x1f8] sm:$0xff] %v1349
        %s1416 = sand.u32 %s137, 1
        %s1417 = scalar_lea.sflag [#allocation3], %s1416
        %s1418 = sand.u32 %s137, 1
        %s1419 = smul.addr %s1418, 512
        %s1420 = scalar_lea.vmem [#allocation2], %s1419
        // Predicated region
        $region41: #{tpu_custom_call.1} parent=39 // pred_check
          %p1421 = pneg %p147
        $region42: #{tpu_custom_call.1} parent=39 // pred_check_branch
          %1423 = sbr.rel (%p1421) target = $region44
        $region43: #{tpu_custom_call.1} parent=39 // pred_region
          %s1424 = smul.u32 64, %s19
          %s1426 = ssub.s32 8192, 8192
          %1427 = vsyncadd %s1417, %s1426
          %s1428 = smul.addr %s1424, 128
          %s1429 = scalar_lea.hbm %s5, %s1428
          %s1430 = sshll.u32 %s1420, 4
          %s1431 = int_to_ptr.vmem [resolvable:$true] %s1430
          %1436 = dma.vmem_to_hbm [thread:$0]  %s1431, 8192, %s1429, %s1417, 128, 128, 8
        $region44: #{tpu_custom_call.1} parent=39 // pred_fallthru
          _
      $region40: #{tpu_custom_call.1} parent=5 // pred_fallthru
        _
      %p1437 = scmp.le.s32.totalorder 2, %s14
      // Predicated region
      $region45: #{tpu_custom_call.1} parent=5 // pred_check
        %p1438 = pneg %p1437
      $region46: #{tpu_custom_call.1} parent=5 // pred_check_branch
        %1440 = sbr.rel (%p1438) target = $region48
      $region47: #{tpu_custom_call.1} parent=5 // pred_region
        %s1441 = ssub.s32 %s14, 2
        // Predicated region
        $region49: #{tpu_custom_call.1} parent=47 // pred_check
          %p1442 = pneg %p153
        $region50: #{tpu_custom_call.1} parent=47 // pred_check_branch
          %1444 = sbr.rel (%p1442) target = $region52
        $region51: #{tpu_custom_call.1} parent=47 // pred_region
          %s1445 = sand.u32 %s138, 1
          %s1446 = scalar_lea.sflag [#allocation3], %s1445
          %s1447 = sand.u32 %s138, 1
          %s1448 = smul.addr %s1447, 512
          %s1449 = scalar_lea.vmem [#allocation2], %s1448
          %1450 = dma.done %s1446, 8192
        $region52: #{tpu_custom_call.1} parent=47 // pred_fallthru
          _
      $region48: #{tpu_custom_call.1} parent=5 // pred_fallthru
        _
    $region6: #{tpu_custom_call.1} parent=1 // loop_footer
      %s18 = sadd.s32 1, %s14
    $region7: #{tpu_custom_call.1} parent=1 // loop_footer_branch
      %13 = sbr.rel target = $region3
    $region8: #{tpu_custom_call.1} parent=1 // loop_exit
      _
    %1451 = vsyncpa [#allocation3], 1
    %s1452 = scalar_lea.sflag [#allocation3], 1
    %1453 = vsyncpa %s1452, 1

</llo_original>
